<compile_context>
chip_gen: v7x
topology: tpu7x:2x2x1
jax: 0.10.0
libtpu: 0.0.40
codegen_flags: <defaults>
</compile_context>

<pallas_src>
import math

import jax
import jax.numpy as jnp
from jax.experimental import pallas as pl
from jax.experimental.pallas import tpu as pltpu


def _bidaf_attention_kernel(c_ref, q_ref, cadd_ref, qadd_ref,
                            cw_ref, qw_ref, cqw_ref, out_ref):
    f32 = jnp.float32
    in_dtype = c_ref.dtype
    h = c_ref.shape[-1]

    c_in = c_ref[...]                      # (Bt, C, H) native dtype (MXU operand)
    q_in = q_ref[...]                      # (Bt, Q, H) native dtype (MXU operand)
    c_f = c_in.astype(f32)                 # f32 copies for elementwise / VPU work only
    q_f = q_in.astype(f32)
    c_add = cadd_ref[...]                  # (Bt, C, 1) f32: bias - (1 - c_mask) * 1e30
    q_add = qadd_ref[...]                  # (Bt, 1, Q) f32: bias - (1 - q_mask) * 1e30
    cw = cw_ref[...]                       # (1, H) f32
    qw = qw_ref[...]                       # (1, H) f32
    cqw = cqw_ref[...]                     # (1, H) f32

    # s0 / s1: VPU multiply + lane-axis reduce (no MXU matvec round trips).
    s0 = jnp.sum(c_f * cw[None], axis=-1, keepdims=True)          # (Bt, C, 1)
    s1 = jnp.sum(q_f * qw[None], axis=-1)                          # (Bt, Q)

    # s2: (C,H) x (Q,H)^T contraction over the last dim, native-dtype MXU operands.
    cq = (c_f * cqw[None]).astype(in_dtype)
    s2 = jnp.einsum('bch,bqh->bcq', cq, q_in,
                    preferred_element_type=f32)                    # (Bt, C, Q)
    s = s2 + s0 + s1[:, None, :]                                   # (Bt, C, Q), no bias yet

    # context -> query softmax (over Q); additive mask carries the scalar bias.
    sq = s + q_add
    sq = sq - jnp.max(sq, axis=-1, keepdims=True)
    eq = jnp.exp(sq)
    p1 = eq / jnp.sum(eq, axis=-1, keepdims=True)                  # (Bt, C, Q) f32

    # query -> context softmax (over C); additive mask carries the scalar bias.
    sc = s + c_add
    sc = sc - jnp.max(sc, axis=1, keepdims=True)
    ec = jnp.exp(sc)
    p2 = ec / jnp.sum(ec, axis=1, keepdims=True)                   # (Bt, C, Q) f32

    p1_m = p1.astype(in_dtype)
    a = jnp.einsum('bcq,bqh->bch', p1_m, q_in,
                   preferred_element_type=f32)                     # (Bt, C, H)
    # qc = s2_attn^T @ c without any in-kernel transpose (contract over the C axis).
    qc = jnp.einsum('bcq,bch->bqh', p2.astype(in_dtype), c_in,
                    preferred_element_type=f32)                    # (Bt, Q, H)
    b = jnp.einsum('bcq,bqh->bch', p1_m, qc.astype(in_dtype),
                   preferred_element_type=f32)                     # (Bt, C, H)

    # Store the four H-wide segments directly (no (C, 4H) concat temp, no extra VMEM pass).
    out_ref[:, :, 0:h] = c_in.astype(out_ref.dtype)
    out_ref[:, :, h:2 * h] = a.astype(out_ref.dtype)
    out_ref[:, :, 2 * h:3 * h] = (c_f * a).astype(out_ref.dtype)
    out_ref[:, :, 3 * h:4 * h] = (c_f * b).astype(out_ref.dtype)


def bidaf_attention(c, q, c_mask, q_mask, c_weight, q_weight, cq_weight, bias):
    """BiDAF attention forward (eval mode).

    Args:
      c:         (B, C, H) context encodings.
      q:         (B, Q, H) query encodings.
      c_mask:    (B, C) 1/0 validity mask for context positions.
      q_mask:    (B, Q) 1/0 validity mask for query positions.
      c_weight:  (H, 1), q_weight: (H, 1), cq_weight: (1, 1, H), bias: (1,) or scalar.
    Returns:
      (B, C, 4H), same dtype as c.
    """
    batch, c_len, hidden = c.shape
    q_len = q.shape[1]

    # One-time parameter / mask layout plumbing (hoisted out of the kernel).
    bias_f = jnp.asarray(bias, jnp.float32).reshape(())
    neg = jnp.float32(-1e30)
    cm = c_mask.astype(jnp.float32).reshape(batch, c_len, 1)
    qm = q_mask.astype(jnp.float32).reshape(batch, 1, q_len)
    c_add = bias_f + (1.0 - cm) * neg                 # additive mask, bias folded in
    q_add = bias_f + (1.0 - qm) * neg
    cw = c_weight.reshape(1, hidden).astype(jnp.float32)
    qw = q_weight.reshape(1, hidden).astype(jnp.float32)
    cqw = cq_weight.reshape(1, hidden).astype(jnp.float32)

    # --- choose batch tile size bt from a VMEM estimate --------------------------------
    in_bytes = c.dtype.itemsize
    per_ex = (
        2 * in_bytes * (c_len + q_len) * hidden            # c, q (double-buffered)
        + 2 * 4 * (c_len + q_len)                          # additive masks
        + 2 * in_bytes * c_len * 4 * hidden                # output (double-buffered)
        + 4 * (6 * c_len * q_len                           # s/sq/eq/p1/sc/ec/p2-ish live set
               + 6 * c_len * hidden                        # c_f, a, b, c*a, c*b, qc-ish
               + 2 * q_len * hidden))
    weight_bytes = 4 * 3 * 8 * max(hidden, 128)            # padded (8,128) weight tiles
    budget = 24 * 1024 * 1024                              # stay inside the 32 MiB default

    # Keep at least 2 parallel grid steps when batch >= 2 so both v7x TensorCores get work.
    max_bt = min(8, batch if batch < 2 else max(1, batch // 2))
    bt = 1
    for cand in range(1, max_bt + 1):
        if batch % cand == 0 and cand * per_ex + weight_bytes <= budget:
            bt = cand

    cp_kwargs = {"dimension_semantics": ("parallel",)}
    need = bt * per_ex + weight_bytes + (4 << 20)
    if need > 32 * 1024 * 1024:
        # Cap well below v7x's 64 MiB physical VMEM to leave compiler headroom.
        cp_kwargs["vmem_limit_bytes"] = int(min(need, 48 * 1024 * 1024))

    out = pl.pallas_call(
        _bidaf_attention_kernel,
        out_shape=jax.ShapeDtypeStruct((batch, c_len, 4 * hidden), c.dtype),
        grid_spec=pltpu.PrefetchScalarGridSpec(
            num_scalar_prefetch=0,
            grid=(batch // bt,),
            in_specs=[
                pl.BlockSpec((bt, c_len, hidden), lambda b: (b, 0, 0)),   # c
                pl.BlockSpec((bt, q_len, hidden), lambda b: (b, 0, 0)),   # q
                pl.BlockSpec((bt, c_len, 1), lambda b: (b, 0, 0)),        # c additive mask
                pl.BlockSpec((bt, 1, q_len), lambda b: (b, 0, 0)),        # q additive mask
                pl.BlockSpec((1, hidden), lambda b: (0, 0)),              # c_weight (invariant)
                pl.BlockSpec((1, hidden), lambda b: (0, 0)),              # q_weight (invariant)
                pl.BlockSpec((1, hidden), lambda b: (0, 0)),              # cq_weight (invariant)
            ],
            out_specs=pl.BlockSpec((bt, c_len, 4 * hidden), lambda b: (b, 0, 0)),
        ),
        compiler_params=pltpu.CompilerParams(**cp_kwargs),
    )(c, q, c_add, q_add, cw, qw, cqw)
    return out


def bidaf_attention_reference(c, q, c_mask, q_mask, c_weight, q_weight, cq_weight, bias):
    """Pure-JAX reference mirroring the PyTorch forward (eval mode, where-based masking)."""
    cf = c.astype(jnp.float32)
    qf = q.astype(jnp.float32)
    batch, c_len, hidden = cf.shape
    q_len = qf.shape[1]

    s0 = cf @ c_weight.reshape(hidden, 1)                                    # (B, C, 1)
    s1 = jnp.swapaxes(qf @ q_weight.reshape(hidden, 1), 1, 2)                # (B, 1, Q)
    s2 = jnp.einsum("bch,bqh->bcq", cf * cq_weight.reshape(1, 1, hidden), qf)
    s = s0 + s1 + s2 + jnp.asarray(bias, jnp.float32).reshape(())

    qm = q_mask.astype(jnp.float32).reshape(batch, 1, q_len)
    cm = c_mask.astype(jnp.float32).reshape(batch, c_len, 1)
    p1 = jax.nn.softmax(jnp.where(qm > 0, s, -1e30), axis=2)
    p2 = jax.nn.softmax(jnp.where(cm > 0, s, -1e30), axis=1)

    a = jnp.einsum("bcq,bqh->bch", p1, qf)
    b = jnp.einsum("bcd,bdh->bch", jnp.einsum("bcq,bdq->bcd", p1, p2), cf)
    x = jnp.concatenate([cf, a, cf * a, cf * b], axis=2)
    return x.astype(c.dtype)


if __name__ == "__main__":
    batch, c_len, q_len, hidden = 2, 16, 8, 32

    key = jax.random.PRNGKey(0)
    kc, kq, kcw, kqw, kcq = jax.random.split(key, 5)

    c = jax.random.normal(kc, (batch, c_len, hidden), dtype=jnp.float32)
    q = jax.random.normal(kq, (batch, q_len, hidden), dtype=jnp.float32)

    # Xavier-uniform-ish parameters with PyTorch shapes.
    bv = math.sqrt(6.0 / (hidden + 1))
    c_weight = jax.random.uniform(kcw, (hidden, 1), minval=-bv, maxval=bv, dtype=jnp.float32)
    q_weight = jax.random.uniform(kqw, (hidden, 1), minval=-bv, maxval=bv, dtype=jnp.float32)
    cq_weight = jax.random.uniform(kcq, (1, 1, hidden), minval=-bv, maxval=bv, dtype=jnp.float32)
    bias = jnp.full((1,), 0.05, dtype=jnp.float32)

    # Validity masks with per-example lengths (exercise both masked softmaxes).
    c_valid = jnp.array([c_len, c_len - 5])
    q_valid = jnp.array([q_len, q_len - 3])
    c_mask = (jnp.arange(c_len)[None, :] < c_valid[:, None]).astype(jnp.float32)
    q_mask = (jnp.arange(q_len)[None, :] < q_valid[:, None]).astype(jnp.float32)

    out = bidaf_attention(c, q, c_mask, q_mask, c_weight, q_weight, cq_weight, bias)
    out = jax.block_until_ready(out)

    ref = bidaf_attention_reference(c, q, c_mask, q_mask, c_weight, q_weight, cq_weight, bias)
    assert out.shape == (batch, c_len, 4 * hidden), out.shape
    assert jnp.allclose(out, ref, atol=1e-4, rtol=1e-4), "mismatch vs reference"

    print("KERNEL_OK")
</pallas_src>

<mosaic_0001>
module attributes {stable_mosaic.version = 11 : i64} {
  func.func @_bidaf_attention_kernel(%arg0: i32, %arg1: memref<1x16x32xf32, #tpu.memory_space<vmem>>, %arg2: memref<1x8x32xf32, #tpu.memory_space<vmem>>, %arg3: memref<1x16x1xf32, #tpu.memory_space<vmem>>, %arg4: memref<1x1x8xf32, #tpu.memory_space<vmem>>, %arg5: memref<1x32xf32, #tpu.memory_space<vmem>>, %arg6: memref<1x32xf32, #tpu.memory_space<vmem>>, %arg7: memref<1x32xf32, #tpu.memory_space<vmem>>, %arg8: memref<1x16x128xf32, #tpu.memory_space<vmem>>) attributes {dimension_semantics = [#tpu.dimension_semantics<parallel>], iteration_bounds = array<i64: 2>, scalar_prefetch = 0 : i64, scratch_operands = 0 : i64, tpu.core_type = #tpu.core_type<tc>, window_params = [{transform_indices = @transform_0, window_bounds = array<i64: 1, 16, 32>}, {transform_indices = @transform_1, window_bounds = array<i64: 1, 8, 32>}, {transform_indices = @transform_2, window_bounds = array<i64: 1, 16, 1>}, {transform_indices = @transform_3, window_bounds = array<i64: 1, 1, 8>}, {pipeline_mode = #tpu.pipeline_mode<synchronous>, transform_indices = @transform_4, window_bounds = array<i64: 1, 32>}, {pipeline_mode = #tpu.pipeline_mode<synchronous>, transform_indices = @transform_5, window_bounds = array<i64: 1, 32>}, {pipeline_mode = #tpu.pipeline_mode<synchronous>, transform_indices = @transform_6, window_bounds = array<i64: 1, 32>}, {transform_indices = @transform_7, window_bounds = array<i64: 1, 16, 128>}]} {
    %c0 = arith.constant 0 : index
    %c0_0 = arith.constant 0 : index
    %c0_1 = arith.constant 0 : index
    %0 = vector.load %arg1[%c0, %c0_0, %c0_1] : memref<1x16x32xf32, #tpu.memory_space<vmem>>, vector<1x16x32xf32>
    %c0_2 = arith.constant 0 : index
    %c0_3 = arith.constant 0 : index
    %c0_4 = arith.constant 0 : index
    %1 = vector.load %arg2[%c0_2, %c0_3, %c0_4] : memref<1x8x32xf32, #tpu.memory_space<vmem>>, vector<1x8x32xf32>
    %c0_5 = arith.constant 0 : index
    %c0_6 = arith.constant 0 : index
    %c0_7 = arith.constant 0 : index
    %2 = vector.load %arg3[%c0_5, %c0_6, %c0_7] : memref<1x16x1xf32, #tpu.memory_space<vmem>>, vector<1x16x1xf32>
    %c0_8 = arith.constant 0 : index
    %c0_9 = arith.constant 0 : index
    %c0_10 = arith.constant 0 : index
    %3 = vector.load %arg4[%c0_8, %c0_9, %c0_10] : memref<1x1x8xf32, #tpu.memory_space<vmem>>, vector<1x1x8xf32>
    %c0_11 = arith.constant 0 : index
    %c0_12 = arith.constant 0 : index
    %4 = vector.load %arg5[%c0_11, %c0_12] : memref<1x32xf32, #tpu.memory_space<vmem>>, vector<1x32xf32>
    %c0_13 = arith.constant 0 : index
    %c0_14 = arith.constant 0 : index
    %5 = vector.load %arg6[%c0_13, %c0_14] : memref<1x32xf32, #tpu.memory_space<vmem>>, vector<1x32xf32>
    %c0_15 = arith.constant 0 : index
    %c0_16 = arith.constant 0 : index
    %6 = vector.load %arg7[%c0_15, %c0_16] : memref<1x32xf32, #tpu.memory_space<vmem>>, vector<1x32xf32>
    %7 = vector.shape_cast %4 : vector<1x32xf32> to vector<1x1x32xf32>
    %8 = vector.broadcast %7 : vector<1x1x32xf32> to vector<1x16x32xf32>
    %9 = arith.mulf %0, %8 : vector<1x16x32xf32>
    %cst = arith.constant dense<0.000000e+00> : vector<1x16xf32>
    %10 = vector.multi_reduction <add>, %9, %cst [2] : vector<1x16x32xf32> to vector<1x16xf32>
    %11 = vector.shape_cast %10 : vector<1x16xf32> to vector<1x16x1xf32>
    %12 = vector.shape_cast %5 : vector<1x32xf32> to vector<1x1x32xf32>
    %13 = vector.broadcast %12 : vector<1x1x32xf32> to vector<1x8x32xf32>
    %14 = arith.mulf %1, %13 : vector<1x8x32xf32>
    %cst_17 = arith.constant dense<0.000000e+00> : vector<1x8xf32>
    %15 = vector.multi_reduction <add>, %14, %cst_17 [2] : vector<1x8x32xf32> to vector<1x8xf32>
    %16 = vector.shape_cast %6 : vector<1x32xf32> to vector<1x1x32xf32>
    %17 = vector.broadcast %16 : vector<1x1x32xf32> to vector<1x16x32xf32>
    %18 = arith.mulf %0, %17 : vector<1x16x32xf32>
    "tpu.trace_start"() <{level = 10 : i32, message = "bch,bqh->bcq"}> : () -> ()
    %cst_18 = arith.constant dense<0.000000e+00> : vector<1x16x8xf32>
    %19 = tpu.matmul %18, %1, %cst_18 {dimension_numbers = #tpu.dot_dimension_numbers<[2], [2], [1], [1], [0, 0, 0, 1, 1, 1], [0], [0]>} : vector<1x16x32xf32>, vector<1x8x32xf32>, vector<1x16x8xf32> -> vector<1x16x8xf32>
    "tpu.trace_stop"() : () -> ()
    %20 = vector.broadcast %11 : vector<1x16x1xf32> to vector<1x16x8xf32>
    %21 = arith.addf %19, %20 : vector<1x16x8xf32>
    %22 = vector.shape_cast %15 : vector<1x8xf32> to vector<1x1x8xf32>
    %23 = vector.broadcast %22 : vector<1x1x8xf32> to vector<1x16x8xf32>
    %24 = arith.addf %21, %23 : vector<1x16x8xf32>
    %25 = vector.broadcast %3 : vector<1x1x8xf32> to vector<1x16x8xf32>
    %26 = arith.addf %24, %25 : vector<1x16x8xf32>
    %cst_19 = arith.constant dense<0xFF800000> : vector<1x16xf32>
    %27 = vector.multi_reduction <maximumf>, %26, %cst_19 [2] : vector<1x16x8xf32> to vector<1x16xf32>
    %28 = vector.shape_cast %27 : vector<1x16xf32> to vector<1x16x1xf32>
    %29 = vector.broadcast %28 : vector<1x16x1xf32> to vector<1x16x8xf32>
    %30 = arith.subf %26, %29 : vector<1x16x8xf32>
    %31 = math.exp %30 : vector<1x16x8xf32>
    %cst_20 = arith.constant dense<0.000000e+00> : vector<1x16xf32>
    %32 = vector.multi_reduction <add>, %31, %cst_20 [2] : vector<1x16x8xf32> to vector<1x16xf32>
    %33 = vector.shape_cast %32 : vector<1x16xf32> to vector<1x16x1xf32>
    %34 = vector.broadcast %33 : vector<1x16x1xf32> to vector<1x16x8xf32>
    %35 = arith.divf %31, %34 : vector<1x16x8xf32>
    %36 = vector.broadcast %2 : vector<1x16x1xf32> to vector<1x16x8xf32>
    %37 = arith.addf %24, %36 : vector<1x16x8xf32>
    %cst_21 = arith.constant dense<0xFF800000> : vector<1x8xf32>
    %38 = vector.multi_reduction <maximumf>, %37, %cst_21 [1] : vector<1x16x8xf32> to vector<1x8xf32>
    %39 = vector.shape_cast %38 : vector<1x8xf32> to vector<1x1x8xf32>
    %40 = vector.broadcast %39 : vector<1x1x8xf32> to vector<1x16x8xf32>
    %41 = arith.subf %37, %40 : vector<1x16x8xf32>
    %42 = math.exp %41 : vector<1x16x8xf32>
    %cst_22 = arith.constant dense<0.000000e+00> : vector<1x8xf32>
    %43 = vector.multi_reduction <add>, %42, %cst_22 [1] : vector<1x16x8xf32> to vector<1x8xf32>
    %44 = vector.shape_cast %43 : vector<1x8xf32> to vector<1x1x8xf32>
    %45 = vector.broadcast %44 : vector<1x1x8xf32> to vector<1x16x8xf32>
    %46 = arith.divf %42, %45 : vector<1x16x8xf32>
    "tpu.trace_start"() <{level = 10 : i32, message = "bcq,bqh->bch"}> : () -> ()
    %cst_23 = arith.constant dense<0.000000e+00> : vector<1x16x32xf32>
    %47 = tpu.matmul %35, %1, %cst_23 {dimension_numbers = #tpu.dot_dimension_numbers<[2], [1], [1], [2], [0, 0, 0, 1, 1, 2], [0], [0]>} : vector<1x16x8xf32>, vector<1x8x32xf32>, vector<1x16x32xf32> -> vector<1x16x32xf32>
    "tpu.trace_stop"() : () -> ()
    "tpu.trace_start"() <{level = 10 : i32, message = "bcq,bch->bqh"}> : () -> ()
    %cst_24 = arith.constant dense<0.000000e+00> : vector<1x8x32xf32>
    %48 = tpu.matmul %46, %0, %cst_24 {dimension_numbers = #tpu.dot_dimension_numbers<[1], [1], [2], [2], [0, 0, 0, 2, 1, 2], [0], [0]>} : vector<1x16x8xf32>, vector<1x16x32xf32>, vector<1x8x32xf32> -> vector<1x8x32xf32>
    "tpu.trace_stop"() : () -> ()
    "tpu.trace_start"() <{level = 10 : i32, message = "bcq,bqh->bch"}> : () -> ()
    %cst_25 = arith.constant dense<0.000000e+00> : vector<1x16x32xf32>
    %49 = tpu.matmul %35, %48, %cst_25 {dimension_numbers = #tpu.dot_dimension_numbers<[2], [1], [1], [2], [0, 0, 0, 1, 1, 2], [0], [0]>} : vector<1x16x8xf32>, vector<1x8x32xf32>, vector<1x16x32xf32> -> vector<1x16x32xf32>
    "tpu.trace_stop"() : () -> ()
    %c0_26 = arith.constant 0 : index
    %c0_27 = arith.constant 0 : index
    %c0_28 = arith.constant 0 : index
    %50 = vector.load %arg8[%c0_26, %c0_27, %c0_28] : memref<1x16x128xf32, #tpu.memory_space<vmem>>, vector<1x16x32xf32>
    tpu.vector_store %arg8[%c0_26, %c0_27, %c0_28], %0 {strides = array<i32>} : memref<1x16x128xf32, #tpu.memory_space<vmem>>, vector<1x16x32xf32>,
    %c0_29 = arith.constant 0 : index
    %c0_30 = arith.constant 0 : index
    %c32 = arith.constant 32 : index
    %51 = vector.load %arg8[%c0_29, %c0_30, %c32] : memref<1x16x128xf32, #tpu.memory_space<vmem>>, vector<1x16x32xf32>
    tpu.vector_store %arg8[%c0_29, %c0_30, %c32], %47 {strides = array<i32>} : memref<1x16x128xf32, #tpu.memory_space<vmem>>, vector<1x16x32xf32>,
    %52 = arith.mulf %0, %47 : vector<1x16x32xf32>
    %c0_31 = arith.constant 0 : index
    %c0_32 = arith.constant 0 : index
    %c64 = arith.constant 64 : index
    %53 = vector.load %arg8[%c0_31, %c0_32, %c64] : memref<1x16x128xf32, #tpu.memory_space<vmem>>, vector<1x16x32xf32>
    tpu.vector_store %arg8[%c0_31, %c0_32, %c64], %52 {strides = array<i32>} : memref<1x16x128xf32, #tpu.memory_space<vmem>>, vector<1x16x32xf32>,
    %54 = arith.mulf %0, %49 : vector<1x16x32xf32>
    %c0_33 = arith.constant 0 : index
    %c0_34 = arith.constant 0 : index
    %c96 = arith.constant 96 : index
    %55 = vector.load %arg8[%c0_33, %c0_34, %c96] : memref<1x16x128xf32, #tpu.memory_space<vmem>>, vector<1x16x32xf32>
    tpu.vector_store %arg8[%c0_33, %c0_34, %c96], %54 {strides = array<i32>} : memref<1x16x128xf32, #tpu.memory_space<vmem>>, vector<1x16x32xf32>,
    return
  }
  func.func @transform_0(%arg0: i32) -> (i32, i32, i32) {
    %c0_i32 = arith.constant 0 : i32
    %c0_i32_0 = arith.constant 0 : i32
    %c0_i32_1 = arith.constant 0 : i32
    return %arg0, %c0_i32, %c0_i32_0 : i32, i32, i32
  }
  func.func @transform_1(%arg0: i32) -> (i32, i32, i32) {
    %c0_i32 = arith.constant 0 : i32
    %c0_i32_0 = arith.constant 0 : i32
    %c0_i32_1 = arith.constant 0 : i32
    return %arg0, %c0_i32, %c0_i32_0 : i32, i32, i32
  }
  func.func @transform_2(%arg0: i32) -> (i32, i32, i32) {
    %c0_i32 = arith.constant 0 : i32
    %c0_i32_0 = arith.constant 0 : i32
    %c0_i32_1 = arith.constant 0 : i32
    return %arg0, %c0_i32, %c0_i32_0 : i32, i32, i32
  }
  func.func @transform_3(%arg0: i32) -> (i32, i32, i32) {
    %c0_i32 = arith.constant 0 : i32
    %c0_i32_0 = arith.constant 0 : i32
    %c0_i32_1 = arith.constant 0 : i32
    return %arg0, %c0_i32, %c0_i32_0 : i32, i32, i32
  }
  func.func @transform_4(%arg0: i32) -> (i32, i32) {
    %c0_i32 = arith.constant 0 : i32
    %c0_i32_0 = arith.constant 0 : i32
    %c0_i32_1 = arith.constant 0 : i32
    return %c0_i32, %c0_i32_0 : i32, i32
  }
  func.func @transform_5(%arg0: i32) -> (i32, i32) {
    %c0_i32 = arith.constant 0 : i32
    %c0_i32_0 = arith.constant 0 : i32
    %c0_i32_1 = arith.constant 0 : i32
    return %c0_i32, %c0_i32_0 : i32, i32
  }
  func.func @transform_6(%arg0: i32) -> (i32, i32) {
    %c0_i32 = arith.constant 0 : i32
    %c0_i32_0 = arith.constant 0 : i32
    %c0_i32_1 = arith.constant 0 : i32
    return %c0_i32, %c0_i32_0 : i32, i32
  }
  func.func @transform_7(%arg0: i32) -> (i32, i32, i32) {
    %c0_i32 = arith.constant 0 : i32
    %c0_i32_0 = arith.constant 0 : i32
    %c0_i32_1 = arith.constant 0 : i32
    return %arg0, %c0_i32, %c0_i32_0 : i32, i32, i32
  }
}

</mosaic_0001>

<llo_original>
// kernel: tpu_custom_call.1
$region0: #{tpu_custom_call.1}
  #allocation0 [shape = 'u32[]', space=smem, size = 0x4, offset = 0x4, fixed_abs, tag = 'smem constant byte address 0x4 - core index']
  #allocation1 [shape = 'u32[144,128]{1,0:T(1,128)}', space=vmem, size = 0x12000, scoped, tag = 'internal scratch']
  %s0 = inlined_call_operand.vmem [shape: f32[2,16,32], index: 0, kind: input, shape index: {}]
  %s1 = inlined_call_operand.hbm [shape: f32[2,8,32], index: 1, kind: input, shape index: {}]
  %s2 = inlined_call_operand.vmem [shape: f32[2,16,1], index: 2, kind: input, shape index: {}]
  %s3 = inlined_call_operand.vmem [shape: f32[2,1,8], index: 3, kind: input, shape index: {}]
  %s4 = inlined_call_operand.vmem [shape: f32[1,32], index: 4, kind: input, shape index: {}]
  %s5 = inlined_call_operand.vmem [shape: f32[1,32], index: 5, kind: input, shape index: {}]
  %s6 = inlined_call_operand.vmem [shape: f32[1,32], index: 6, kind: input, shape index: {}]
  %s7 = inlined_call_operand.hbm [shape: f32[2,16,128], index: 7, kind: output, shape index: {}]
  %s8 = sld [smem:[#allocation0]]
  $region65: #{tpu_custom_call.1} parent=0
    _
  %s10 = ssub.s32 1, %s8
  %s11 = scalar_select 0, %s10, %s8
  $region1: #{tpu_custom_call.1} parent=0
    #allocation2 [shape = 'u8[8192]{0}', space=vmem, size = 0x2000, scoped, tag = 'input window, operand 1']
    #allocation3 [shape = 's32[2]{0}', space=sflag, size = 0x8, scoped, tag = 'scoped memory for tpu_custom_call.1']
    #allocation4 [shape = 's32[2]{0}', space=sflag, size = 0x8, scoped, tag = 'scoped memory for tpu_custom_call.1']
    #allocation5 [shape = 'u8[16384]{0}', space=vmem, size = 0x4000, scoped, tag = 'output window, operand 0']
    %12 = vsyncpa [#allocation3], 0
    %s13 = scalar_lea.sflag [#allocation3], 1
    %14 = vsyncpa %s13, 0
    %15 = vsyncpa [#allocation4], 0
    %s16 = scalar_lea.sflag [#allocation4], 1
    %17 = vsyncpa %s16, 0
    loop: start=0, step=1, limit=4
    $region2: #{tpu_custom_call.1} parent=1 // loop_pre_header
      _
    $region3: #{tpu_custom_call.1} parent=1 // loop_header
      %s19 = sphi 0, %s23
      %p20 = scmp.ge.s32.totalorder %s19, 4
      %s29 = sphi 0, %s31
      %s32 = sphi 0, %s29
      %s33 = sphi 0, %s32
      %s49 = sphi 0, %s33
      %s55 = sphi 0, %s57
      %s58 = sphi 0, %s55
      %s59 = sphi 0, %s58
      %s75 = sphi 0, %s59
      %s81 = sphi 0, %s83
      %s84 = sphi 0, %s81
      %s85 = sphi 0, %s84
      %s101 = sphi 0, %s85
      %s107 = sphi 0, %s109
      %s110 = sphi 0, %s107
      %s111 = sphi 0, %s110
      %s127 = sphi 0, %s111
      %s131 = sphi 0, %s131
      %s133 = sphi 0, %s131
      %s134 = sphi 0, %s133
      %s148 = sphi 0, %s134
      %s152 = sphi 0, %s152
      %s154 = sphi 0, %s152
      %s155 = sphi 0, %s154
      %s169 = sphi 0, %s155
      %s173 = sphi 0, %s173
      %s175 = sphi 0, %s173
      %s176 = sphi 0, %s175
      %s190 = sphi 0, %s176
      %s196 = sphi 0, %s198
      %s199 = sphi 0, %s196
      %s200 = sphi 0, %s199
      %s216 = sphi 0, %s200
    $region4: #{tpu_custom_call.1} parent=1 // loop_header_branch
      %22 = sbr.rel (%p20) target = $region8
    $region5: #{tpu_custom_call.1} parent=1 // loop_body
      %s24 = ssub.s32 %s19, 1
      %s25 = ssub.s32 %s19, 2
      %s26 = sadd.s32 %s19, 1
      %s27 = ssub.s32 %s19, %s26
      %p28 = scmp.eq.s32.totalorder %s27, 0
      %s30 = sadd.s32 %s29, 1
      %s31 = scalar_select %p28, %s29, %s30
      %p34 = pneg %p28
      %p35 = scmp.eq.s32.totalorder %s19, 1
      %p36 = por %p34, %p35
      %p37 = scmp.ne.s32.totalorder %s29, %s32
      %p38 = scmp.eq.s32.totalorder %s19, 0
      %p39 = por %p37, %p38
      %p40 = scmp.ne.s32.totalorder %s29, %s32
      %p41 = scmp.eq.s32.totalorder %s24, 1
      %p42 = por %p40, %p41
      %p43 = scmp.ne.s32.totalorder %s32, %s33
      %p44 = scmp.eq.s32.totalorder %s24, 0
      %p45 = por %p43, %p44
      %p46 = scmp.ne.s32.totalorder %s32, %s33
      %p47 = scmp.eq.s32.totalorder %s25, 1
      %p48 = por %p46, %p47
      %p50 = scmp.ne.s32.totalorder %s33, %s49
      %p51 = scmp.eq.s32.totalorder %s25, 0
      %p52 = por %p50, %p51
      %s53 = ssub.s32 %s19, %s26
      %p54 = scmp.eq.s32.totalorder %s53, 0
      %s56 = sadd.s32 %s55, 1
      %s57 = scalar_select %p54, %s55, %s56
      %p60 = pneg %p54
      %p61 = scmp.eq.s32.totalorder %s19, 1
      %p62 = por %p60, %p61
      %p63 = scmp.ne.s32.totalorder %s55, %s58
      %p64 = scmp.eq.s32.totalorder %s19, 0
      %p65 = por %p63, %p64
      %p66 = scmp.ne.s32.totalorder %s55, %s58
      %p67 = scmp.eq.s32.totalorder %s24, 1
      %p68 = por %p66, %p67
      %p69 = scmp.ne.s32.totalorder %s58, %s59
      %p70 = scmp.eq.s32.totalorder %s24, 0
      %p71 = por %p69, %p70
      %p72 = scmp.ne.s32.totalorder %s58, %s59
      %p73 = scmp.eq.s32.totalorder %s25, 1
      %p74 = por %p72, %p73
      %p76 = scmp.ne.s32.totalorder %s59, %s75
      %p77 = scmp.eq.s32.totalorder %s25, 0
      %p78 = por %p76, %p77
      %s79 = ssub.s32 %s19, %s26
      %p80 = scmp.eq.s32.totalorder %s79, 0
      %s82 = sadd.s32 %s81, 1
      %s83 = scalar_select %p80, %s81, %s82
      %p86 = pneg %p80
      %p87 = scmp.eq.s32.totalorder %s19, 1
      %p88 = por %p86, %p87
      %p89 = scmp.ne.s32.totalorder %s81, %s84
      %p90 = scmp.eq.s32.totalorder %s19, 0
      %p91 = por %p89, %p90
      %p92 = scmp.ne.s32.totalorder %s81, %s84
      %p93 = scmp.eq.s32.totalorder %s24, 1
      %p94 = por %p92, %p93
      %p95 = scmp.ne.s32.totalorder %s84, %s85
      %p96 = scmp.eq.s32.totalorder %s24, 0
      %p97 = por %p95, %p96
      %p98 = scmp.ne.s32.totalorder %s84, %s85
      %p99 = scmp.eq.s32.totalorder %s25, 1
      %p100 = por %p98, %p99
      %p102 = scmp.ne.s32.totalorder %s85, %s101
      %p103 = scmp.eq.s32.totalorder %s25, 0
      %p104 = por %p102, %p103
      %s105 = ssub.s32 %s19, %s26
      %p106 = scmp.eq.s32.totalorder %s105, 0
      %s108 = sadd.s32 %s107, 1
      %s109 = scalar_select %p106, %s107, %s108
      %p112 = pneg %p106
      %p113 = scmp.eq.s32.totalorder %s19, 1
      %p114 = por %p112, %p113
      %p115 = scmp.ne.s32.totalorder %s107, %s110
      %p116 = scmp.eq.s32.totalorder %s19, 0
      %p117 = por %p115, %p116
      %p118 = scmp.ne.s32.totalorder %s107, %s110
      %p119 = scmp.eq.s32.totalorder %s24, 1
      %p120 = por %p118, %p119
      %p121 = scmp.ne.s32.totalorder %s110, %s111
      %p122 = scmp.eq.s32.totalorder %s24, 0
      %p123 = por %p121, %p122
      %p124 = scmp.ne.s32.totalorder %s110, %s111
      %p125 = scmp.eq.s32.totalorder %s25, 1
      %p126 = por %p124, %p125
      %p128 = scmp.ne.s32.totalorder %s111, %s127
      %p129 = scmp.eq.s32.totalorder %s25, 0
      %p130 = por %p128, %p129
      %s132 = sadd.s32 %s131, 1
      %p135 = scmp.eq.s32.totalorder %s19, 1
      %p136 = scmp.ne.s32.totalorder %s131, %s133
      %p137 = scmp.eq.s32.totalorder %s19, 0
      %p138 = por %p136, %p137
      %p139 = scmp.ne.s32.totalorder %s131, %s133
      %p140 = scmp.eq.s32.totalorder %s24, 1
      %p141 = por %p139, %p140
      %p142 = scmp.ne.s32.totalorder %s133, %s134
      %p143 = scmp.eq.s32.totalorder %s24, 0
      %p144 = por %p142, %p143
      %p145 = scmp.ne.s32.totalorder %s133, %s134
      %p146 = scmp.eq.s32.totalorder %s25, 1
      %p147 = por %p145, %p146
      %p149 = scmp.ne.s32.totalorder %s134, %s148
      %p150 = scmp.eq.s32.totalorder %s25, 0
      %p151 = por %p149, %p150
      %s153 = sadd.s32 %s152, 1
      %p156 = scmp.eq.s32.totalorder %s19, 1
      %p157 = scmp.ne.s32.totalorder %s152, %s154
      %p158 = scmp.eq.s32.totalorder %s19, 0
      %p159 = por %p157, %p158
      %p160 = scmp.ne.s32.totalorder %s152, %s154
      %p161 = scmp.eq.s32.totalorder %s24, 1
      %p162 = por %p160, %p161
      %p163 = scmp.ne.s32.totalorder %s154, %s155
      %p164 = scmp.eq.s32.totalorder %s24, 0
      %p165 = por %p163, %p164
      %p166 = scmp.ne.s32.totalorder %s154, %s155
      %p167 = scmp.eq.s32.totalorder %s25, 1
      %p168 = por %p166, %p167
      %p170 = scmp.ne.s32.totalorder %s155, %s169
      %p171 = scmp.eq.s32.totalorder %s25, 0
      %p172 = por %p170, %p171
      %s174 = sadd.s32 %s173, 1
      %p177 = scmp.eq.s32.totalorder %s19, 1
      %p178 = scmp.ne.s32.totalorder %s173, %s175
      %p179 = scmp.eq.s32.totalorder %s19, 0
      %p180 = por %p178, %p179
      %p181 = scmp.ne.s32.totalorder %s173, %s175
      %p182 = scmp.eq.s32.totalorder %s24, 1
      %p183 = por %p181, %p182
      %p184 = scmp.ne.s32.totalorder %s175, %s176
      %p185 = scmp.eq.s32.totalorder %s24, 0
      %p186 = por %p184, %p185
      %p187 = scmp.ne.s32.totalorder %s175, %s176
      %p188 = scmp.eq.s32.totalorder %s25, 1
      %p189 = por %p187, %p188
      %p191 = scmp.ne.s32.totalorder %s176, %s190
      %p192 = scmp.eq.s32.totalorder %s25, 0
      %p193 = por %p191, %p192
      %s194 = ssub.s32 %s19, %s26
      %p195 = scmp.eq.s32.totalorder %s194, 0
      %s197 = sadd.s32 %s196, 1
      %s198 = scalar_select %p195, %s196, %s197
      %p201 = pneg %p195
      %p202 = scmp.eq.s32.totalorder %s19, 1
      %p203 = por %p201, %p202
      %p204 = scmp.ne.s32.totalorder %s196, %s199
      %p205 = scmp.eq.s32.totalorder %s19, 0
      %p206 = por %p204, %p205
      %p207 = scmp.ne.s32.totalorder %s196, %s199
      %p208 = scmp.eq.s32.totalorder %s24, 1
      %p209 = por %p207, %p208
      %p210 = scmp.ne.s32.totalorder %s199, %s200
      %p211 = scmp.eq.s32.totalorder %s24, 0
      %p212 = por %p210, %p211
      %p213 = scmp.ne.s32.totalorder %s199, %s200
      %p214 = scmp.eq.s32.totalorder %s25, 1
      %p215 = por %p213, %p214
      %p217 = scmp.ne.s32.totalorder %s200, %s216
      %p218 = scmp.eq.s32.totalorder %s25, 0
      %p219 = por %p217, %p218
      %p220 = scmp.le.s32.totalorder 1, %s19
      %p221 = scmp.lt.s32.totalorder %s19, 3
      %p222 = pnand %p220, %p221
      %p223 = pneg %p222
      // Predicated region
      $region9: #{tpu_custom_call.1} parent=5 // pred_check
        _
      $region10: #{tpu_custom_call.1} parent=5 // pred_check_branch
        %225 = sbr.rel (%p222) target = $region12
      $region11: #{tpu_custom_call.1} parent=5 // pred_region
        %s226 = ssub.s32 %s19, 1
        // Predicated region
        $region13: #{tpu_custom_call.1} parent=11 // pred_check
          %p227 = pneg %p144
        $region14: #{tpu_custom_call.1} parent=11 // pred_check_branch
          %229 = sbr.rel (%p227) target = $region16
        $region15: #{tpu_custom_call.1} parent=11 // pred_region
          _
        $region16: #{tpu_custom_call.1} parent=11 // pred_fallthru
          _
        // Predicated region
        $region17: #{tpu_custom_call.1} parent=11 // pred_check
          %p230 = pneg %p165
        $region18: #{tpu_custom_call.1} parent=11 // pred_check_branch
          %232 = sbr.rel (%p230) target = $region20
        $region19: #{tpu_custom_call.1} parent=11 // pred_region
          _
        $region20: #{tpu_custom_call.1} parent=11 // pred_fallthru
          _
        // Predicated region
        $region21: #{tpu_custom_call.1} parent=11 // pred_check
          %p233 = pneg %p186
        $region22: #{tpu_custom_call.1} parent=11 // pred_check_branch
          %235 = sbr.rel (%p233) target = $region24
        $region23: #{tpu_custom_call.1} parent=11 // pred_region
          _
        $region24: #{tpu_custom_call.1} parent=11 // pred_fallthru
          _
      $region12: #{tpu_custom_call.1} parent=5 // pred_fallthru
        _
      %p236 = scmp.lt.s32.totalorder %s19, 2
      // Predicated region
      $region25: #{tpu_custom_call.1} parent=5 // pred_check
        %p237 = pneg %p236
      $region26: #{tpu_custom_call.1} parent=5 // pred_check_branch
        %239 = sbr.rel (%p237) target = $region28
      $region27: #{tpu_custom_call.1} parent=5 // pred_region
        // Predicated region
        $region29: #{tpu_custom_call.1} parent=27 // pred_check
          %p240 = pneg %p39
        $region30: #{tpu_custom_call.1} parent=27 // pred_check_branch
          %242 = sbr.rel (%p240) target = $region32
        $region31: #{tpu_custom_call.1} parent=27 // pred_region
          %p243 = scmp.lt.s32.totalorder %s19, 1
          %s244 = scalar_select %p243, %s19, 1
          %s245 = smul.addr %s244, 2
          %s246 = smul.addr %s245, 8
          %s247 = scalar_lea.vmem %s0, %s246
        $region32: #{tpu_custom_call.1} parent=27 // pred_fallthru
          _
        // Predicated region
        $region33: #{tpu_custom_call.1} parent=27 // pred_check
          %p248 = pneg %p65
        $region34: #{tpu_custom_call.1} parent=27 // pred_check_branch
          %250 = sbr.rel (%p248) target = $region36
        $region35: #{tpu_custom_call.1} parent=27 // pred_region
          %s251 = sand.u32 %s55, 1
          %s252 = scalar_lea.sflag [#allocation3], %s251
          %s253 = sand.u32 %s55, 1
          %s254 = smul.addr %s253, 8
          %s255 = scalar_lea.vmem [#allocation2], %s254
          %s257 = ssub.s32 128, 128
          %258 = vsyncadd %s252, %s257
          %s259 = smul.addr %s19, 128
          %s260 = scalar_lea.hbm %s1, %s259
          %s262 = sshll.u32 %s255, 4
          %s263 = int_to_ptr.vmem [resolvable:$true] %s262
          %265 = dma.hbm_to_vmem [thread:$0]  %s260, 128, %s263, %s252
        $region36: #{tpu_custom_call.1} parent=27 // pred_fallthru
          _
        // Predicated region
        $region37: #{tpu_custom_call.1} parent=27 // pred_check
          %p266 = pneg %p91
        $region38: #{tpu_custom_call.1} parent=27 // pred_check_branch
          %268 = sbr.rel (%p266) target = $region40
        $region39: #{tpu_custom_call.1} parent=27 // pred_region
          %p269 = scmp.lt.s32.totalorder %s19, 1
          %s270 = scalar_select %p269, %s19, 1
          %s271 = smul.addr %s270, 2
          %s272 = smul.addr %s271, 8
          %s273 = scalar_lea.vmem %s2, %s272
        $region40: #{tpu_custom_call.1} parent=27 // pred_fallthru
          _
        // Predicated region
        $region41: #{tpu_custom_call.1} parent=27 // pred_check
          %p274 = pneg %p117
        $region42: #{tpu_custom_call.1} parent=27 // pred_check_branch
          %276 = sbr.rel (%p274) target = $region44
        $region43: #{tpu_custom_call.1} parent=27 // pred_region
          %p277 = scmp.lt.s32.totalorder %s19, 1
          %s278 = scalar_select %p277, %s19, 1
          %s279 = scalar_lea.vmem %s3, %s278
        $region44: #{tpu_custom_call.1} parent=27 // pred_fallthru
          _
      $region28: #{tpu_custom_call.1} parent=5 // pred_fallthru
        _
      %p280 = scmp.le.s32.totalorder 1, %s19
      %p281 = scmp.lt.s32.totalorder %s19, 3
      %p282 = pnand %p280, %p281
      %p283 = pneg %p282
      // Predicated region
      $region45: #{tpu_custom_call.1} parent=5 // pred_check
        _
      $region46: #{tpu_custom_call.1} parent=5 // pred_check_branch
        %285 = sbr.rel (%p282) target = $region48
      $region47: #{tpu_custom_call.1} parent=5 // pred_region
        %s286 = ssub.s32 %s19, 1
        %s287 = sand.u32 %s58, 1
        %s288 = scalar_lea.sflag [#allocation3], %s287
        %s289 = sand.u32 %s58, 1
        %s290 = smul.addr %s289, 8
        %s291 = scalar_lea.vmem [#allocation2], %s290
        // Predicated region
        $region49: #{tpu_custom_call.1} parent=47 // pred_check
          %p292 = pneg %p71
        $region50: #{tpu_custom_call.1} parent=47 // pred_check_branch
          %294 = sbr.rel (%p292) target = $region52
        $region51: #{tpu_custom_call.1} parent=47 // pred_region
          %295 = dma.done %s288, 128
        $region52: #{tpu_custom_call.1} parent=47 // pred_fallthru
          _
        %p296 = scmp.lt.s32.totalorder %s24, 1
        %s297 = scalar_select %p296, %s24, 1
        %s298 = smul.addr %s297, 2
        %s299 = smul.addr %s298, 8
        %s300 = scalar_lea.vmem %s0, %s299
        %p301 = pneg %p45
        %p302 = pneg %p42
        %s303 = sand.u32 %s58, 1
        %s304 = scalar_lea.sflag [#allocation3], %s303
        %s305 = sand.u32 %s58, 1
        %s306 = smul.addr %s305, 8
        %s307 = scalar_lea.vmem [#allocation2], %s306
        %p308 = pneg %p71
        %p309 = pneg %p68
        %p310 = scmp.lt.s32.totalorder %s24, 1
        %s311 = scalar_select %p310, %s24, 1
        %s312 = smul.addr %s311, 2
        %s313 = smul.addr %s312, 8
        %s314 = scalar_lea.vmem %s2, %s313
        %p315 = pneg %p97
        %p316 = pneg %p94
        %p317 = scmp.lt.s32.totalorder %s24, 1
        %s318 = scalar_select %p317, %s24, 1
        %s319 = scalar_lea.vmem %s3, %s318
        %p320 = pneg %p123
        %p321 = pneg %p120
        %p322 = pneg %p144
        %p323 = pneg %p141
        %p324 = pneg %p165
        %p325 = pneg %p162
        %p326 = pneg %p186
        %p327 = pneg %p183
        %p328 = pneg %p212
        %p329 = pneg %p209
        %s330 = sand.u32 %s199, 1
        %s331 = scalar_lea.sflag [#allocation4], %s330
        %s332 = sand.u32 %s199, 1
        %s333 = smul.addr %s332, 16
        %s334 = scalar_lea.vmem [#allocation5], %s333
        %p335 = scmp.lt.s32.totalorder %s24, 1
        %s336 = scalar_select %p335, %s24, 1
        %s337 = smul.addr %s336, 2
        %s338 = smul.addr %s337, 8
        %s339 = scalar_lea.vmem %s0, %s338
        %p340 = scmp.lt.s32.totalorder %s24, 1
        %s341 = scalar_select %p340, %s24, 1
        %s342 = smul.addr %s341, 2
        %s343 = smul.addr %s342, 8
        %s344 = scalar_lea.vmem %s2, %s343
        %p345 = scmp.lt.s32.totalorder %s24, 1
        %s346 = scalar_select %p345, %s24, 1
        %s347 = scalar_lea.vmem %s3, %s346
        %v348 = vld [vmem:[%s339] sm:$0xff]
        %v349 = vld [vmem:[%s339 + $0x8] sm:$0xff]
        %v350 = vld [vmem:[%s291] sm:$0xff]
        %v351 = vld [vmem:[%s344] sm:$0xff]
        %v352 = vld [vmem:[%s344 + $0x8] sm:$0xff]
        %v353 = vld [vmem:[%s347] sm:$0x1]
        %v354 = vld [vmem:[%s4] sm:$0x1]
        %v355 = vld [vmem:[%s5] sm:$0x1]
        %v356 = vld [vmem:[%s6] sm:$0x1]
        %v358 = vlaneseq
        %v359 = vshrl.u32 %v358, 7
        %v360 = vsub.s32 0, %v359
        %v361 = vrot.slane %v354, %v360
        %v363 = vmul.f32 %v348, %v361
        %v364 = vmul.f32 %v349, %v361
        %vm365 = vcmask 261120
        %v366 = vsel %vm365, %v363, 0.0
        %367 = vadd.xlane.f32.xlu0 %v366
        %v368 = vpop.xlane.xlu0 %367
        %v369 = vsel %vm365, %v364, 0.0
        %370 = vadd.xlane.f32.xlu0 %v369
        %v371 = vpop.xlane.xlu0 %370
        %v373 = vlaneseq
        %v374 = vshrl.u32 %v373, 7
        %v375 = vsub.s32 0, %v374
        %v376 = vrot.slane %v355, %v375
        %v378 = vmul.f32 %v350, %v376
        %v379 = vsel %vm365, %v378, 0.0
        %380 = vadd.xlane.f32.xlu0 %v379
        %v381 = vpop.xlane.xlu0 %380
        %v383 = vlaneseq
        %v384 = vshrl.u32 %v383, 7
        %v385 = vsub.s32 0, %v384
        %v386 = vrot.slane %v356, %v385
        %v388 = vmul.f32 %v348, %v386
        %v389 = vmul.f32 %v349, %v386
        %v391 = vsel %vm365, %v388, 0
        %v394 = vsel %vm365, %v389, 0
        %v397 = vsel %vm365, %v350, 0
        %399 = vmatprep.subr.mxu0 0.0
        %400 = vmatpush1.xpose.msra.mxu0 %v397
        %401 = vmatprep.subr.mxu0 0.0
        %402 = vmatpush1.xpose.msra.mxu0 0.0
        %403 = vmatprep.subr.mxu0 0.0
        %404 = vmatpush1.xpose.msra.mxu0 0.0
        %405 = vmatprep.subr.mxu0 0.0
        %406 = vmatpush1.xpose.msra.mxu0 0.0
        %407 = vmatprep.subr.mxu0 0.0
        %408 = vmatpush1.xpose.msra.mxu0 0.0
        %409 = vmatprep.subr.mxu0 0.0
        %410 = vmatpush1.xpose.msra.mxu0 0.0
        %411 = vmatprep.subr.mxu0 0.0
        %412 = vmatpush1.xpose.msra.mxu0 0.0
        %413 = vmatprep.subr.mxu0 0.0
        %414 = vmatpush1.xpose.msra.mxu0 0.0
        %415 = vmatprep.subr.mxu0 0.0
        %416 = vmatpush1.xpose.msra.mxu0 0.0
        %417 = vmatprep.subr.mxu0 0.0
        %418 = vmatpush1.xpose.msra.mxu0 0.0
        %419 = vmatprep.subr.mxu0 0.0
        %420 = vmatpush1.xpose.msra.mxu0 0.0
        %421 = vmatprep.subr.mxu0 0.0
        %422 = vmatpush1.xpose.msra.mxu0 0.0
        %423 = vmatprep.subr.mxu0 0.0
        %424 = vmatpush1.xpose.msra.mxu0 0.0
        %425 = vmatprep.subr.mxu0 0.0
        %426 = vmatpush1.xpose.msra.mxu0 0.0
        %427 = vmatprep.subr.mxu0 0.0
        %428 = vmatpush1.xpose.msra.mxu0 0.0
        %429 = vmatprep.subr.mxu0 0.0
        %430 = vmatpush1.xpose.msra.mxu0 0.0
        %431 = vmatprep.subr.mxu0 0.0
        %432 = vmatpush1.xpose.msra.mxu0 0.0
        %433 = vmatprep.subr.mxu0 0.0
        %434 = vmatpush1.xpose.msra.mxu0 0.0
        %435 = vmatprep.subr.mxu0 0.0
        %436 = vmatpush1.xpose.msra.mxu0 0.0
        %437 = vmatprep.subr.mxu0 0.0
        %438 = vmatpush1.xpose.msra.mxu0 0.0
        %439 = vmatprep.subr.mxu0 0.0
        %440 = vmatpush1.xpose.msra.mxu0 0.0
        %441 = vmatprep.subr.mxu0 0.0
        %442 = vmatpush1.xpose.msra.mxu0 0.0
        %443 = vmatprep.subr.mxu0 0.0
        %444 = vmatpush1.xpose.msra.mxu0 0.0
        %445 = vmatprep.subr.mxu0 0.0
        %446 = vmatpush1.xpose.msra.mxu0 0.0
        %447 = vmatprep.subr.mxu0 0.0
        %448 = vmatpush1.xpose.msra.mxu0 0.0
        %449 = vmatprep.subr.mxu0 0.0
        %450 = vmatpush1.xpose.msra.mxu0 0.0
        %451 = vmatprep.subr.mxu0 0.0
        %452 = vmatpush1.xpose.msra.mxu0 0.0
        %453 = vmatprep.subr.mxu0 0.0
        %454 = vmatpush1.xpose.msra.mxu0 0.0
        %455 = vmatprep.subr.mxu0 0.0
        %456 = vmatpush1.xpose.msra.mxu0 0.0
        %457 = vmatprep.subr.mxu0 0.0
        %458 = vmatpush1.xpose.msra.mxu0 0.0
        %459 = vmatprep.subr.mxu0 0.0
        %460 = vmatpush1.xpose.msra.mxu0 0.0
        %461 = vmatprep.subr.mxu0 0.0
        %462 = vmatpush1.xpose.msra.mxu0 0.0
        %463 = vmatprep.mubr.f32.mxu0 0.0
        %464 = vmatmul.mubr.f32.gmra.mrb[0].mxu0 %v391
        %v465 = vpop.f32.mrb[0].mxu0
        %v466 = vadd.f32 %v368, %v465
        %v467 = vpop.f32.mrb[0].mxu0
        %468 = vmatprep.mubr.f32.mxu0 0.0
        %469 = vmatmul.mubr.f32.gmra.mrb[0].mxu0 %v394
        %v470 = vpop.f32.mrb[0].mxu0
        %v471 = vadd.f32 %v371, %v470
        %v472 = vpop.f32.mrb[0].mxu0
        %473 = vdwg.mxu0
        %v475 = vlaneseq
        %v476 = vand.u32 %v475, 127
        %v477 = vlaneseq
        %v478 = vshrl.u32 %v477, 7
        %v479 = vsub.s32 %v476, %v478
        %v480 = vrot.slane %v381, %v479
        %vm481 = vcmask 1042434
        %v482 = vsel %vm481, %v480, %v480
        %vm483 = vcmask 1043459
        %v484 = vsel %vm483, %v480, %v482
        %vm485 = vcmask 1044484
        %v486 = vsel %vm485, %v480, %v484
        %vm487 = vcmask 1045509
        %v488 = vsel %vm487, %v480, %v486
        %vm489 = vcmask 1046534
        %v490 = vsel %vm489, %v480, %v488
        %vm491 = vcmask 1047559
        %v492 = vsel %vm491, %v480, %v490
        %v494 = vadd.f32 %v466, %v492
        %v495 = vadd.f32 %v471, %v492
        %v497 = vlaneseq
        %v498 = vshrl.u32 %v497, 7
        %v499 = vsub.s32 0, %v498
        %v500 = vrot.slane %v353, %v499
        %v502 = vadd.f32 %v494, %v500
        %v503 = vadd.f32 %v495, %v500
        %vm504 = vcmask 64512
        %v505 = vsel %vm504, %v502, -inf
        %506 = vmax.xlane.f32.xlu0 %v505
        %v507 = vpop.xlane.xlu0 %506
        %v508 = vsel %vm504, %v503, -inf
        %509 = vmax.xlane.f32.xlu0 %v508
        %v510 = vpop.xlane.xlu0 %509
        %v511 = vsub.f32 %v502, %v507
        %v512 = vsub.f32 %v503, %v510
        %v513 = vmul.f32 %v511, 1.442695
        %v514 = vpow.pop %v513
        %v515 = vmul.f32 %v512, 1.442695
        %v516 = vpow.pop %v515
        %v517 = vsel %vm504, %v514, 0.0
        %518 = vadd.xlane.f32.xlu0 %v517
        %v519 = vpop.xlane.xlu0 %518
        %v520 = vsel %vm504, %v516, 0.0
        %521 = vadd.xlane.f32.xlu0 %v520
        %v522 = vpop.xlane.xlu0 %521
        %v523 = vrcp.pop %v519
        %v524 = vmul.f32 %v514, %v523
        %v525 = vrcp.pop %v522
        %v526 = vmul.f32 %v516, %v525
        %528 = vset.pattern.permute.xlu0 0
        %529 = vperm.xlu0 %528, %v351
        %v530 = vpop.permute.xlu0 %529
        %533 = vset.pattern.permute.xlu0 0
        %534 = vperm.xlu0 %533, %v352
        %v535 = vpop.permute.xlu0 %534
        %v537 = vadd.f32 %v494, %v530
        %v538 = vadd.f32 %v495, %v535
        %v539 = vsel %vm504, %v537, -inf
        %v540 = vsel %vm504, %v538, -inf
        %v541 = vmax.f32 %v539, %v540
        %v542 = vrot.slane %v541, 4
        %v543 = vmax.f32 %v541, %v542
        %v544 = vrot.slane %v543, 2
        %v545 = vmax.f32 %v543, %v544
        %v546 = vrot.slane %v545, 1
        %v547 = vmax.f32 %v545, %v546
        %v548 = vsub.f32 %v537, %v547
        %v549 = vsub.f32 %v538, %v547
        %v550 = vmul.f32 %v548, 1.442695
        %v551 = vpow.pop %v550
        %v552 = vmul.f32 %v549, 1.442695
        %v553 = vpow.pop %v552
        %v554 = vsel %vm504, %v551, 0.0
        %v555 = vsel %vm504, %v553, 0.0
        %v556 = vadd.f32 %v554, %v555
        %v557 = vrot.slane %v556, 4
        %v558 = vadd.f32 %v556, %v557
        %v559 = vrot.slane %v558, 2
        %v560 = vadd.f32 %v558, %v559
        %v561 = vrot.slane %v560, 1
        %v562 = vadd.f32 %v560, %v561
        %v563 = vrcp.pop %v562
        %v564 = vmul.f32 %v551, %v563
        %v565 = vmul.f32 %v553, %v563
        %v567 = vsel %vm504, %v524, 0
        %v570 = vsel %vm504, %v526, 0
        %572 = vmatprep.subr.mxu0 0.0
        %573 = vmatpush1.msra.mxu0 %v350
        %574 = vmatprep.subr.mxu0 0.0
        %575 = vmatpush1.msra.mxu0 0.0
        %576 = vmatprep.subr.mxu0 0.0
        %577 = vmatpush1.msra.mxu0 0.0
        %578 = vmatprep.subr.mxu0 0.0
        %579 = vmatpush1.msra.mxu0 0.0
        %580 = vmatprep.subr.mxu0 0.0
        %581 = vmatpush1.msra.mxu0 0.0
        %582 = vmatprep.subr.mxu0 0.0
        %583 = vmatpush1.msra.mxu0 0.0
        %584 = vmatprep.subr.mxu0 0.0
        %585 = vmatpush1.msra.mxu0 0.0
        %586 = vmatprep.subr.mxu0 0.0
        %587 = vmatpush1.msra.mxu0 0.0
        %588 = vmatprep.subr.mxu0 0.0
        %589 = vmatpush1.msra.mxu0 0.0
        %590 = vmatprep.subr.mxu0 0.0
        %591 = vmatpush1.msra.mxu0 0.0
        %592 = vmatprep.subr.mxu0 0.0
        %593 = vmatpush1.msra.mxu0 0.0
        %594 = vmatprep.subr.mxu0 0.0
        %595 = vmatpush1.msra.mxu0 0.0
        %596 = vmatprep.subr.mxu0 0.0
        %597 = vmatpush1.msra.mxu0 0.0
        %598 = vmatprep.subr.mxu0 0.0
        %599 = vmatpush1.msra.mxu0 0.0
        %600 = vmatprep.subr.mxu0 0.0
        %601 = vmatpush1.msra.mxu0 0.0
        %602 = vmatprep.subr.mxu0 0.0
        %603 = vmatpush1.msra.mxu0 0.0
        %604 = vmatprep.subr.mxu0 0.0
        %605 = vmatpush1.msra.mxu0 0.0
        %606 = vmatprep.subr.mxu0 0.0
        %607 = vmatpush1.msra.mxu0 0.0
        %608 = vmatprep.subr.mxu0 0.0
        %609 = vmatpush1.msra.mxu0 0.0
        %610 = vmatprep.subr.mxu0 0.0
        %611 = vmatpush1.msra.mxu0 0.0
        %612 = vmatprep.subr.mxu0 0.0
        %613 = vmatpush1.msra.mxu0 0.0
        %614 = vmatprep.subr.mxu0 0.0
        %615 = vmatpush1.msra.mxu0 0.0
        %616 = vmatprep.subr.mxu0 0.0
        %617 = vmatpush1.msra.mxu0 0.0
        %618 = vmatprep.subr.mxu0 0.0
        %619 = vmatpush1.msra.mxu0 0.0
        %620 = vmatprep.subr.mxu0 0.0
        %621 = vmatpush1.msra.mxu0 0.0
        %622 = vmatprep.subr.mxu0 0.0
        %623 = vmatpush1.msra.mxu0 0.0
        %624 = vmatprep.subr.mxu0 0.0
        %625 = vmatpush1.msra.mxu0 0.0
        %626 = vmatprep.subr.mxu0 0.0
        %627 = vmatpush1.msra.mxu0 0.0
        %628 = vmatprep.subr.mxu0 0.0
        %629 = vmatpush1.msra.mxu0 0.0
        %630 = vmatprep.subr.mxu0 0.0
        %631 = vmatpush1.msra.mxu0 0.0
        %632 = vmatprep.subr.mxu0 0.0
        %633 = vmatpush1.msra.mxu0 0.0
        %634 = vmatprep.subr.mxu0 0.0
        %635 = vmatpush1.msra.mxu0 0.0
        %636 = vmatprep.mubr.f32.mxu0 0.0
        %637 = vmatmul.mubr.f32.gmra.mrb[0].mxu0 %v567
        %v638 = vpop.f32.mrb[0].mxu0
        %v639 = vadd.f32 0.0, %v638
        %v640 = vpop.f32.mrb[0].mxu0
        %641 = vmatprep.mubr.f32.mxu0 0.0
        %642 = vmatmul.mubr.f32.gmra.mrb[0].mxu0 %v570
        %v643 = vpop.f32.mrb[0].mxu0
        %v644 = vadd.f32 0.0, %v643
        %v645 = vpop.f32.mrb[0].mxu0
        %646 = vdwg.mxu0
        %647 = vxpose.xlu0.b32.start [1/16] %v564, 128
        %648 = vxpose.xlu0.b32.cont [2/16] %v565, 128
        %649 = vxpose.xlu0.b32.cont [3/16] 0.0, 128
        %650 = vxpose.xlu0.b32.cont [4/16] 0.0, 128
        %651 = vxpose.xlu0.b32.cont [5/16] 0.0, 128
        %652 = vxpose.xlu0.b32.cont [6/16] 0.0, 128
        %653 = vxpose.xlu0.b32.cont [7/16] 0.0, 128
        %654 = vxpose.xlu0.b32.cont [8/16] 0.0, 128
        %655 = vxpose.xlu0.b32.cont [9/16] 0.0, 128
        %656 = vxpose.xlu0.b32.cont [10/16] 0.0, 128
        %657 = vxpose.xlu0.b32.cont [11/16] 0.0, 128
        %658 = vxpose.xlu0.b32.cont [12/16] 0.0, 128
        %659 = vxpose.xlu0.b32.cont [13/16] 0.0, 128
        %660 = vxpose.xlu0.b32.cont [14/16] 0.0, 128
        %661 = vxpose.xlu0.b32.cont [15/16] 0.0, 128
        %662 = vxpose.xlu0.b32.end [16/16] 0.0, 128
        %v663 = vpop.trf.xlu0
        %v664 = vpop.trf.xlu0
        %v665 = vpop.trf.xlu0
        %v666 = vpop.trf.xlu0
        %v667 = vpop.trf.xlu0
        %v668 = vpop.trf.xlu0
        %v669 = vpop.trf.xlu0
        %v670 = vpop.trf.xlu0
        %v671 = vpop.trf.xlu0
        %v672 = vpop.trf.xlu0
        %v673 = vpop.trf.xlu0
        %v674 = vpop.trf.xlu0
        %v675 = vpop.trf.xlu0
        %v676 = vpop.trf.xlu0
        %v677 = vpop.trf.xlu0
        %v678 = vpop.trf.xlu0
        %vm679 = vcmask 130048
        %v681 = vsel %vm679, %v663, 0
        %683 = vmatprep.subr.mxu0 0.0
        %684 = vmatpush1.msra.mxu0 %v348
        %685 = vmatprep.subr.mxu0 0.0
        %686 = vmatpush1.msra.mxu0 %v349
        %687 = vmatprep.subr.mxu0 0.0
        %688 = vmatpush1.msra.mxu0 0.0
        %689 = vmatprep.subr.mxu0 0.0
        %690 = vmatpush1.msra.mxu0 0.0
        %691 = vmatprep.subr.mxu0 0.0
        %692 = vmatpush1.msra.mxu0 0.0
        %693 = vmatprep.subr.mxu0 0.0
        %694 = vmatpush1.msra.mxu0 0.0
        %695 = vmatprep.subr.mxu0 0.0
        %696 = vmatpush1.msra.mxu0 0.0
        %697 = vmatprep.subr.mxu0 0.0
        %698 = vmatpush1.msra.mxu0 0.0
        %699 = vmatprep.subr.mxu0 0.0
        %700 = vmatpush1.msra.mxu0 0.0
        %701 = vmatprep.subr.mxu0 0.0
        %702 = vmatpush1.msra.mxu0 0.0
        %703 = vmatprep.subr.mxu0 0.0
        %704 = vmatpush1.msra.mxu0 0.0
        %705 = vmatprep.subr.mxu0 0.0
        %706 = vmatpush1.msra.mxu0 0.0
        %707 = vmatprep.subr.mxu0 0.0
        %708 = vmatpush1.msra.mxu0 0.0
        %709 = vmatprep.subr.mxu0 0.0
        %710 = vmatpush1.msra.mxu0 0.0
        %711 = vmatprep.subr.mxu0 0.0
        %712 = vmatpush1.msra.mxu0 0.0
        %713 = vmatprep.subr.mxu0 0.0
        %714 = vmatpush1.msra.mxu0 0.0
        %715 = vmatprep.subr.mxu0 0.0
        %716 = vmatpush1.msra.mxu0 0.0
        %717 = vmatprep.subr.mxu0 0.0
        %718 = vmatpush1.msra.mxu0 0.0
        %719 = vmatprep.subr.mxu0 0.0
        %720 = vmatpush1.msra.mxu0 0.0
        %721 = vmatprep.subr.mxu0 0.0
        %722 = vmatpush1.msra.mxu0 0.0
        %723 = vmatprep.subr.mxu0 0.0
        %724 = vmatpush1.msra.mxu0 0.0
        %725 = vmatprep.subr.mxu0 0.0
        %726 = vmatpush1.msra.mxu0 0.0
        %727 = vmatprep.subr.mxu0 0.0
        %728 = vmatpush1.msra.mxu0 0.0
        %729 = vmatprep.subr.mxu0 0.0
        %730 = vmatpush1.msra.mxu0 0.0
        %731 = vmatprep.subr.mxu0 0.0
        %732 = vmatpush1.msra.mxu0 0.0
        %733 = vmatprep.subr.mxu0 0.0
        %734 = vmatpush1.msra.mxu0 0.0
        %735 = vmatprep.subr.mxu0 0.0
        %736 = vmatpush1.msra.mxu0 0.0
        %737 = vmatprep.subr.mxu0 0.0
        %738 = vmatpush1.msra.mxu0 0.0
        %739 = vmatprep.subr.mxu0 0.0
        %740 = vmatpush1.msra.mxu0 0.0
        %741 = vmatprep.subr.mxu0 0.0
        %742 = vmatpush1.msra.mxu0 0.0
        %743 = vmatprep.subr.mxu0 0.0
        %744 = vmatpush1.msra.mxu0 0.0
        %745 = vmatprep.subr.mxu0 0.0
        %746 = vmatpush1.msra.mxu0 0.0
        %747 = vmatprep.mubr.f32.mxu0 0.0
        %748 = vmatmul.mubr.f32.gmra.mrb[0].mxu0 %v681
        %v749 = vpop.f32.mrb[0].mxu0
        %v750 = vadd.f32 0.0, %v749
        %v751 = vpop.f32.mrb[0].mxu0
        %752 = vdwg.mxu0
        %753 = vmatprep.subr.mxu0 0.0
        %754 = vmatpush1.msra.mxu0 %v750
        %755 = vmatprep.subr.mxu0 0.0
        %756 = vmatpush1.msra.mxu0 0.0
        %757 = vmatprep.subr.mxu0 0.0
        %758 = vmatpush1.msra.mxu0 0.0
        %759 = vmatprep.subr.mxu0 0.0
        %760 = vmatpush1.msra.mxu0 0.0
        %761 = vmatprep.subr.mxu0 0.0
        %762 = vmatpush1.msra.mxu0 0.0
        %763 = vmatprep.subr.mxu0 0.0
        %764 = vmatpush1.msra.mxu0 0.0
        %765 = vmatprep.subr.mxu0 0.0
        %766 = vmatpush1.msra.mxu0 0.0
        %767 = vmatprep.subr.mxu0 0.0
        %768 = vmatpush1.msra.mxu0 0.0
        %769 = vmatprep.subr.mxu0 0.0
        %770 = vmatpush1.msra.mxu0 0.0
        %771 = vmatprep.subr.mxu0 0.0
        %772 = vmatpush1.msra.mxu0 0.0
        %773 = vmatprep.subr.mxu0 0.0
        %774 = vmatpush1.msra.mxu0 0.0
        %775 = vmatprep.subr.mxu0 0.0
        %776 = vmatpush1.msra.mxu0 0.0
        %777 = vmatprep.subr.mxu0 0.0
        %778 = vmatpush1.msra.mxu0 0.0
        %779 = vmatprep.subr.mxu0 0.0
        %780 = vmatpush1.msra.mxu0 0.0
        %781 = vmatprep.subr.mxu0 0.0
        %782 = vmatpush1.msra.mxu0 0.0
        %783 = vmatprep.subr.mxu0 0.0
        %784 = vmatpush1.msra.mxu0 0.0
        %785 = vmatprep.subr.mxu0 0.0
        %786 = vmatpush1.msra.mxu0 0.0
        %787 = vmatprep.subr.mxu0 0.0
        %788 = vmatpush1.msra.mxu0 0.0
        %789 = vmatprep.subr.mxu0 0.0
        %790 = vmatpush1.msra.mxu0 0.0
        %791 = vmatprep.subr.mxu0 0.0
        %792 = vmatpush1.msra.mxu0 0.0
        %793 = vmatprep.subr.mxu0 0.0
        %794 = vmatpush1.msra.mxu0 0.0
        %795 = vmatprep.subr.mxu0 0.0
        %796 = vmatpush1.msra.mxu0 0.0
        %797 = vmatprep.subr.mxu0 0.0
        %798 = vmatpush1.msra.mxu0 0.0
        %799 = vmatprep.subr.mxu0 0.0
        %800 = vmatpush1.msra.mxu0 0.0
        %801 = vmatprep.subr.mxu0 0.0
        %802 = vmatpush1.msra.mxu0 0.0
        %803 = vmatprep.subr.mxu0 0.0
        %804 = vmatpush1.msra.mxu0 0.0
        %805 = vmatprep.subr.mxu0 0.0
        %806 = vmatpush1.msra.mxu0 0.0
        %807 = vmatprep.subr.mxu0 0.0
        %808 = vmatpush1.msra.mxu0 0.0
        %809 = vmatprep.subr.mxu0 0.0
        %810 = vmatpush1.msra.mxu0 0.0
        %811 = vmatprep.subr.mxu0 0.0
        %812 = vmatpush1.msra.mxu0 0.0
        %813 = vmatprep.subr.mxu0 0.0
        %814 = vmatpush1.msra.mxu0 0.0
        %815 = vmatprep.subr.mxu0 0.0
        %816 = vmatpush1.msra.mxu0 0.0
        %817 = vmatprep.mubr.f32.mxu0 0.0
        %818 = vmatmul.mubr.f32.gmra.mrb[0].mxu0 %v567
        %v819 = vpop.f32.mrb[0].mxu0
        %v820 = vadd.f32 0.0, %v819
        %v821 = vpop.f32.mrb[0].mxu0
        %822 = vmatprep.mubr.f32.mxu0 0.0
        %823 = vmatmul.mubr.f32.gmra.mrb[0].mxu0 %v570
        %v824 = vpop.f32.mrb[0].mxu0
        %v825 = vadd.f32 0.0, %v824
        %v826 = vpop.f32.mrb[0].mxu0
        %827 = vdwg.mxu0
        %828 = vst.msk [vmem:[%s334] sm:$0xff] %vm365, %v348
        %829 = vst.msk [vmem:[%s334 + $0x8] sm:$0xff] %vm365, %v349
        %832 = vrot.lane.b32.xlu0 %v639, 32
        %v833 = vpop.permute.xlu0 %832
        %834 = vrot.lane.b32.xlu0 %v644, 32
        %v835 = vpop.permute.xlu0 %834
        %vm838 = vcmask 523520
        %839 = vst.msk [vmem:[%s334] sm:$0xff] %vm838, %v833
        %840 = vst.msk [vmem:[%s334 + $0x8] sm:$0xff] %vm838, %v835
        %v841 = vmul.f32 %v348, %v639
        %v842 = vmul.f32 %v349, %v644
        %845 = vrot.lane.b32.xlu0 %v841, 64
        %v846 = vpop.permute.xlu0 %845
        %847 = vrot.lane.b32.xlu0 %v842, 64
        %v848 = vpop.permute.xlu0 %847
        %vm851 = vcmask 785920
        %852 = vst.msk [vmem:[%s334] sm:$0xff] %vm851, %v846
        %853 = vst.msk [vmem:[%s334 + $0x8] sm:$0xff] %vm851, %v848
        %v854 = vmul.f32 %v348, %v820
        %v855 = vmul.f32 %v349, %v825
        %858 = vrot.lane.b32.xlu0 %v854, 96
        %v859 = vpop.permute.xlu0 %858
        %860 = vrot.lane.b32.xlu0 %v855, 96
        %v861 = vpop.permute.xlu0 %860
        %vm864 = vcmask 1048320
        %865 = vst.msk [vmem:[%s334] sm:$0xff] %vm864, %v859
        %866 = vst.msk [vmem:[%s334 + $0x8] sm:$0xff] %vm864, %v861
        %s867 = sand.u32 %s199, 1
        %s868 = scalar_lea.sflag [#allocation4], %s867
        %s869 = sand.u32 %s199, 1
        %s870 = smul.addr %s869, 16
        %s871 = scalar_lea.vmem [#allocation5], %s870
        // Predicated region
        $region53: #{tpu_custom_call.1} parent=47 // pred_check
          %p872 = pneg %p209
        $region54: #{tpu_custom_call.1} parent=47 // pred_check_branch
          %874 = sbr.rel (%p872) target = $region56
        $region55: #{tpu_custom_call.1} parent=47 // pred_region
          %s876 = ssub.s32 256, 256
          %877 = vsyncadd %s868, %s876
          %s878 = smul.addr %s24, 2
          %s879 = smul.addr %s878, 128
          %s880 = scalar_lea.hbm %s7, %s879
          %s881 = sshll.u32 %s871, 4
          %s882 = int_to_ptr.vmem [resolvable:$true] %s881
          %887 = dma.vmem_to_hbm [thread:$0]  %s882, 256, %s880, %s868, 128, 128, 8
        $region56: #{tpu_custom_call.1} parent=47 // pred_fallthru
          _
      $region48: #{tpu_custom_call.1} parent=5 // pred_fallthru
        _
      %p888 = scmp.le.s32.totalorder 2, %s19
      // Predicated region
      $region57: #{tpu_custom_call.1} parent=5 // pred_check
        %p889 = pneg %p888
      $region58: #{tpu_custom_call.1} parent=5 // pred_check_branch
        %891 = sbr.rel (%p889) target = $region60
      $region59: #{tpu_custom_call.1} parent=5 // pred_region
        %s892 = ssub.s32 %s19, 2
        // Predicated region
        $region61: #{tpu_custom_call.1} parent=59 // pred_check
          %p893 = pneg %p215
        $region62: #{tpu_custom_call.1} parent=59 // pred_check_branch
          %895 = sbr.rel (%p893) target = $region64
        $region63: #{tpu_custom_call.1} parent=59 // pred_region
          %s896 = sand.u32 %s200, 1
          %s897 = scalar_lea.sflag [#allocation4], %s896
          %s898 = sand.u32 %s200, 1
          %s899 = smul.addr %s898, 16
          %s900 = scalar_lea.vmem [#allocation5], %s899
          %901 = dma.done %s897, 256
        $region64: #{tpu_custom_call.1} parent=59 // pred_fallthru
          _
      $region60: #{tpu_custom_call.1} parent=5 // pred_fallthru
        _
    $region6: #{tpu_custom_call.1} parent=1 // loop_footer
      %s23 = sadd.s32 1, %s19
    $region7: #{tpu_custom_call.1} parent=1 // loop_footer_branch
      %18 = sbr.rel target = $region3
    $region8: #{tpu_custom_call.1} parent=1 // loop_exit
      _
    %902 = vsyncpa [#allocation3], 1
    %s903 = scalar_lea.sflag [#allocation3], 1
    %904 = vsyncpa %s903, 1
    %905 = vsyncpa [#allocation4], 1
    %s906 = scalar_lea.sflag [#allocation4], 1
    %907 = vsyncpa %s906, 1

</llo_original>
